<compile_context>
chip_gen: v6e
topology: v6e:2x2x1
jax: 0.10.0
libtpu: 0.0.40
codegen_flags: <defaults>
</compile_context>

<pallas_src>
import math
from functools import partial

import jax
import jax.numpy as jnp
from jax.experimental import pallas as pl
from jax.experimental.pallas import tpu as pltpu


def _standardise_kernel(params_ref, x_ref, o_ref):
    """Elementwise (x - mean) * inv_std on one (rows, cols) tile.

    params_ref : SMEM f32 (2,)  -- [mean, 1/sqrt(var)], scalar-prefetched
    x_ref      : VMEM     (br, bc)
    o_ref      : VMEM     (br, bc)
    """
    mean = params_ref[0]
    inv_std = params_ref[1]
    x = x_ref[...].astype(jnp.float32)
    o_ref[...] = ((x - mean) * inv_std).astype(o_ref.dtype)


def _pick_block(full, want, align):
    """Largest tile <= `want` that is `align`-aligned and divides `full`;
    falls back to the full extent (always legal for the (8,128) rule)."""
    blk = min(want, full)
    if blk == full:
        return full
    blk = (blk // align) * align
    if blk == 0 or full % blk != 0:
        return full
    return blk


def standardisation_forward(x, mean, var, *, block_rows=256, block_cols=2048):
    """Pallas implementation of Standardisation.forward.

    x    : any shape; last dim is treated as the lane (fast) axis.
    mean : scalar buffer, shape (1,) or ()
    var  : scalar buffer, shape (1,) or ()
    """
    orig_shape = x.shape
    N = orig_shape[-1]
    M = int(math.prod(orig_shape[:-1])) if len(orig_shape) > 1 else 1
    x2 = x.reshape(M, N)

    # scalars -> (2,) f32 array, delivered to the kernel via SMEM prefetch
    mean_s = jnp.asarray(mean, jnp.float32).reshape(())
    inv_std = jax.lax.rsqrt(jnp.asarray(var, jnp.float32).reshape(()))
    params = jnp.stack([mean_s, inv_std])  # (2,) f32

    br = _pick_block(M, block_rows, 8)     # sublane-aligned row tile
    bc = _pick_block(N, block_cols, 128)   # lane-aligned col tile
    grid = (M // br, N // bc)

    out = pl.pallas_call(
        _standardise_kernel,
        out_shape=jax.ShapeDtypeStruct((M, N), x.dtype),
        grid_spec=pltpu.PrefetchScalarGridSpec(
            num_scalar_prefetch=1,
            grid=grid,
            in_specs=[pl.BlockSpec((br, bc), lambda i, j, p: (i, j))],
            out_specs=pl.BlockSpec((br, bc), lambda i, j, p: (i, j)),
        ),
        compiler_params=pltpu.CompilerParams(
            dimension_semantics=("parallel", "parallel")),
    )(params, x2)
    return out.reshape(orig_shape)


def _reference(x, mean, var):
    """Pure-JAX reference matching the PyTorch forward."""
    m = jnp.asarray(mean, jnp.float32).reshape(())
    v = jnp.asarray(var, jnp.float32).reshape(())
    return (x - m) / jnp.sqrt(v)


if __name__ == "__main__":
    # small KWS-style waveform batch: batch=2, channels=4, time=2048
    B, C, T = 2, 4, 2048
    key = jax.random.PRNGKey(0)
    x = jax.random.normal(key, (B, C, T), dtype=jnp.float32)

    # registered buffers from the PyTorch module
    mean = jnp.array([0.03], dtype=jnp.float32)
    var = jnp.array([0.5], dtype=jnp.float32)

    out = standardisation_forward(x, mean, var)
    out = jax.block_until_ready(out)

    ref = _reference(x, mean, var)
    assert out.shape == x.shape
    assert jnp.allclose(out, ref, atol=1e-5, rtol=1e-5)

    print("KERNEL_OK")
</pallas_src>

<mosaic_0001>
module attributes {stable_mosaic.version = 11 : i64} {
  func.func @_standardise_kernel(%arg0: i32, %arg1: i32, %arg2: memref<2xf32, #tpu.memory_space<smem>>, %arg3: memref<8x2048xf32, #tpu.memory_space<vmem>>, %arg4: memref<8x2048xf32, #tpu.memory_space<vmem>>) attributes {dimension_semantics = [#tpu.dimension_semantics<parallel>, #tpu.dimension_semantics<parallel>], iteration_bounds = array<i64: 1, 1>, scalar_prefetch = 1 : i64, scratch_operands = 0 : i64, tpu.core_type = #tpu.core_type<tc>, window_params = [{transform_indices = @transform_0, window_bounds = array<i64: 8, 2048>}, {transform_indices = @transform_1, window_bounds = array<i64: 8, 2048>}]} {
    %c0 = arith.constant 0 : index
    %0 = memref.load %arg2[%c0] : memref<2xf32, #tpu.memory_space<smem>>
    %c1 = arith.constant 1 : index
    %1 = memref.load %arg2[%c1] : memref<2xf32, #tpu.memory_space<smem>>
    %c0_0 = arith.constant 0 : index
    %c0_1 = arith.constant 0 : index
    %2 = vector.load %arg3[%c0_0, %c0_1] : memref<8x2048xf32, #tpu.memory_space<vmem>>, vector<8x2048xf32>
    %3 = vector.broadcast %0 : f32 to vector<8x2048xf32>
    %4 = arith.subf %2, %3 : vector<8x2048xf32>
    %5 = vector.broadcast %1 : f32 to vector<8x2048xf32>
    %6 = arith.mulf %4, %5 : vector<8x2048xf32>
    %c0_2 = arith.constant 0 : index
    %c0_3 = arith.constant 0 : index
    %7 = vector.load %arg4[%c0_2, %c0_3] : memref<8x2048xf32, #tpu.memory_space<vmem>>, vector<8x2048xf32>
    tpu.vector_store %arg4[%c0_2, %c0_3], %6 {strides = array<i32>} : memref<8x2048xf32, #tpu.memory_space<vmem>>, vector<8x2048xf32>,
    return
  }
  func.func @transform_0(%arg0: i32, %arg1: i32, %arg2: memref<2xf32, #tpu.memory_space<smem>>) -> (i32, i32) {
    %c0_i32 = arith.constant 0 : i32
    return %arg0, %arg1 : i32, i32
  }
  func.func @transform_1(%arg0: i32, %arg1: i32, %arg2: memref<2xf32, #tpu.memory_space<smem>>) -> (i32, i32) {
    %c0_i32 = arith.constant 0 : i32
    return %arg0, %arg1 : i32, i32
  }
}

</mosaic_0001>

<llo_original>
// kernel: tpu_custom_call.1
$region0: #{tpu_custom_call.1}
  #allocation0 [shape = 'u32[]', space=smem, size = 0x4, offset = 0x4, fixed_abs, tag = 'smem constant byte address 0x4 - core index']
  #allocation1 [shape = 'u32[144,128]{1,0:T(1,128)}', space=vmem, size = 0x12000, scoped, tag = 'internal scratch']
  #allocation2 [shape = 's32[1]{0}', space=sflag, size = 0x4, scoped, tag = 'scoped memory for tpu_custom_call.1']
  #allocation3 [shape = 'u8[512]{0}', space=smem, size = 0x200, scoped, tag = 'prefetched SMEM operand 0']
  %s0 = inlined_call_operand.hbm [shape: f32[2], index: 0, kind: input, shape index: {}]
  %s1 = inlined_call_operand.hbm [shape: f32[8,2048], index: 1, kind: input, shape index: {}]
  %s2 = inlined_call_operand.hbm [shape: f32[8,2048], index: 2, kind: output, shape index: {}]
  %s3 = sld [smem:[#allocation0]]
  $region18: #{tpu_custom_call.1} parent=0
    _
  %s5 = ssub.s32 1, %s3
  %s6 = scalar_select 0, %s5, %s3
  %8 = dma.hbm_to_smem %s0, 16, [#allocation3], [#allocation2]
  %9 = dma.done [#allocation2], 16
  %10 = sfence
  $region1: #{tpu_custom_call.1} parent=0
    #allocation4 [shape = 'u8[65536]{0}', space=vmem, size = 0x10000, scoped, tag = 'input window, operand 1, single buffered']
    #allocation5 [shape = 's32[1]{0}', space=sflag, size = 0x4, scoped, tag = 'scoped memory for tpu_custom_call.1']
    #allocation6 [shape = 's32[1]{0}', space=sflag, size = 0x4, scoped, tag = 'scoped memory for tpu_custom_call.1']
    #allocation7 [shape = 'u8[65536]{0}', space=vmem, size = 0x10000, scoped, tag = 'output window, operand 0, single buffered']
    %11 = vsyncpa [#allocation5], 0
    %12 = vsyncpa [#allocation6], 0
    // Predicated region
    $region2: #{tpu_custom_call.1} parent=1 // pred_check
      _
    $region3: #{tpu_custom_call.1} parent=1 // pred_check_branch
      %14 = sbr.rel (0) target = $region5
    $region4: #{tpu_custom_call.1} parent=1 // pred_region
      %s16 = ssub.s32 2048, 2048
      %17 = vsyncadd [#allocation5], %s16
      %s19 = sshll.u32 [#allocation4], 4
      %s20 = int_to_ptr.vmem [resolvable:$true] %s19
      %22 = dma.hbm_to_vmem [thread:$0]  %s1, 2048, %s20, [#allocation5]
    $region5: #{tpu_custom_call.1} parent=1 // pred_fallthru
      _
    // Predicated region
    $region6: #{tpu_custom_call.1} parent=1 // pred_check
      _
    $region7: #{tpu_custom_call.1} parent=1 // pred_check_branch
      %24 = sbr.rel (0) target = $region9
    $region8: #{tpu_custom_call.1} parent=1 // pred_region
      %25 = dma.done [#allocation5], 2048
    $region9: #{tpu_custom_call.1} parent=1 // pred_fallthru
      _
    %s26 = sld [smem:[#allocation3]]
    %s27 = sld [smem:[#allocation3 + $0x1]]
    %v28 = vld [vmem:[#allocation4] sm:$0xff]
    %v29 = vld [vmem:[#allocation4 + $0x8] sm:$0xff]
    %v30 = vld [vmem:[#allocation4 + $0x10] sm:$0xff]
    %v31 = vld [vmem:[#allocation4 + $0x18] sm:$0xff]
    %v32 = vld [vmem:[#allocation4 + $0x20] sm:$0xff]
    %v33 = vld [vmem:[#allocation4 + $0x28] sm:$0xff]
    %v34 = vld [vmem:[#allocation4 + $0x30] sm:$0xff]
    %v35 = vld [vmem:[#allocation4 + $0x38] sm:$0xff]
    %v36 = vld [vmem:[#allocation4 + $0x40] sm:$0xff]
    %v37 = vld [vmem:[#allocation4 + $0x48] sm:$0xff]
    %v38 = vld [vmem:[#allocation4 + $0x50] sm:$0xff]
    %v39 = vld [vmem:[#allocation4 + $0x58] sm:$0xff]
    %v40 = vld [vmem:[#allocation4 + $0x60] sm:$0xff]
    %v41 = vld [vmem:[#allocation4 + $0x68] sm:$0xff]
    %v42 = vld [vmem:[#allocation4 + $0x70] sm:$0xff]
    %v43 = vld [vmem:[#allocation4 + $0x78] sm:$0xff]
    %v44 = vstv %s26
    %v45 = vsub.f32 %v28, %v44
    %v46 = vsub.f32 %v29, %v44
    %v47 = vsub.f32 %v30, %v44
    %v48 = vsub.f32 %v31, %v44
    %v49 = vsub.f32 %v32, %v44
    %v50 = vsub.f32 %v33, %v44
    %v51 = vsub.f32 %v34, %v44
    %v52 = vsub.f32 %v35, %v44
    %v53 = vsub.f32 %v36, %v44
    %v54 = vsub.f32 %v37, %v44
    %v55 = vsub.f32 %v38, %v44
    %v56 = vsub.f32 %v39, %v44
    %v57 = vsub.f32 %v40, %v44
    %v58 = vsub.f32 %v41, %v44
    %v59 = vsub.f32 %v42, %v44
    %v60 = vsub.f32 %v43, %v44
    %v61 = vstv %s27
    %v62 = vmul.f32 %v45, %v61
    %v63 = vmul.f32 %v46, %v61
    %v64 = vmul.f32 %v47, %v61
    %v65 = vmul.f32 %v48, %v61
    %v66 = vmul.f32 %v49, %v61
    %v67 = vmul.f32 %v50, %v61
    %v68 = vmul.f32 %v51, %v61
    %v69 = vmul.f32 %v52, %v61
    %v70 = vmul.f32 %v53, %v61
    %v71 = vmul.f32 %v54, %v61
    %v72 = vmul.f32 %v55, %v61
    %v73 = vmul.f32 %v56, %v61
    %v74 = vmul.f32 %v57, %v61
    %v75 = vmul.f32 %v58, %v61
    %v76 = vmul.f32 %v59, %v61
    %v77 = vmul.f32 %v60, %v61
    %78 = vst [vmem:[#allocation7] sm:$0xff] %v62
    %79 = vst [vmem:[#allocation7 + $0x8] sm:$0xff] %v63
    %80 = vst [vmem:[#allocation7 + $0x10] sm:$0xff] %v64
    %81 = vst [vmem:[#allocation7 + $0x18] sm:$0xff] %v65
    %82 = vst [vmem:[#allocation7 + $0x20] sm:$0xff] %v66
    %83 = vst [vmem:[#allocation7 + $0x28] sm:$0xff] %v67
    %84 = vst [vmem:[#allocation7 + $0x30] sm:$0xff] %v68
    %85 = vst [vmem:[#allocation7 + $0x38] sm:$0xff] %v69
    %86 = vst [vmem:[#allocation7 + $0x40] sm:$0xff] %v70
    %87 = vst [vmem:[#allocation7 + $0x48] sm:$0xff] %v71
    %88 = vst [vmem:[#allocation7 + $0x50] sm:$0xff] %v72
    %89 = vst [vmem:[#allocation7 + $0x58] sm:$0xff] %v73
    %90 = vst [vmem:[#allocation7 + $0x60] sm:$0xff] %v74
    %91 = vst [vmem:[#allocation7 + $0x68] sm:$0xff] %v75
    %92 = vst [vmem:[#allocation7 + $0x70] sm:$0xff] %v76
    %93 = vst [vmem:[#allocation7 + $0x78] sm:$0xff] %v77
    // Predicated region
    $region10: #{tpu_custom_call.1} parent=1 // pred_check
      _
    $region11: #{tpu_custom_call.1} parent=1 // pred_check_branch
      %95 = sbr.rel (0) target = $region13
    $region12: #{tpu_custom_call.1} parent=1 // pred_region
      %s97 = ssub.s32 2048, 2048
      %98 = vsyncadd [#allocation6], %s97
      %s100 = sshll.u32 [#allocation7], 4
      %s101 = int_to_ptr.vmem [resolvable:$true] %s100
      %103 = dma.vmem_to_hbm [thread:$0]  %s101, 2048, %s2, [#allocation6]
    $region13: #{tpu_custom_call.1} parent=1 // pred_fallthru
      _
    // Predicated region
    $region14: #{tpu_custom_call.1} parent=1 // pred_check
      _
    $region15: #{tpu_custom_call.1} parent=1 // pred_check_branch
      %105 = sbr.rel (0) target = $region17
    $region16: #{tpu_custom_call.1} parent=1 // pred_region
      %106 = dma.done [#allocation6], 2048
    $region17: #{tpu_custom_call.1} parent=1 // pred_fallthru
      _
    %107 = vsyncpa [#allocation5], 1
    %108 = vsyncpa [#allocation6], 1

</llo_original>
